<compile_context>
chip_gen: v7x
topology: tpu7x:2x2x1
jax: 0.10.0
libtpu: 0.0.40
codegen_flags: <defaults>
</compile_context>

<pallas_src>
import jax
import jax.numpy as jnp
import numpy as np
from jax.experimental import pallas as pl
from jax.experimental.pallas import tpu as pltpu

_B_TILE_DEFAULT = 8192            # rows per grid step (multiple of 128)


def _round_up(x, m):
    return ((x + m - 1) // m) * m


def _norm_logcdf(z):
    """Numerically stable log Phi(z) in float32, single branch-free select.

    Uses the Numerical Recipes 'erfcc' rational approximation in the scaled
    form  erfc(x) = t * exp(-x^2 + g(t)),  t = 1/(1 + x/2),  whose *relative*
    error is < 1.2e-7 for all x >= 0.  Hence for z < 0 the log is exact
    analytically (log(t/2) - x^2 + g(t)): no underflow, no deep-tail branch,
    and the gradient is smooth everywhere.
    EUP cost per element: 1 divide + 1 exp + 1 log.
    """
    ax = jnp.abs(z) * 0.7071067811865476          # |z| / sqrt(2)
    t = 1.0 / (1.0 + 0.5 * ax)
    g = (-1.26551223 + t * (1.00002368 + t * (0.37409196 + t * (0.09678418
         + t * (-0.18628806 + t * (0.27886807 + t * (-1.13520398
         + t * (1.48851587 + t * (-0.82215223 + t * 0.17087277)))))))))
    neg_ax2 = -(ax * ax)
    erfc_ax = t * jnp.exp(neg_ax2 + g)            # erfc(|z|/sqrt(2)) in (0, 1]

    nonneg = z >= 0.0
    # z >= 0: Phi = 1 - erfc/2  -> log(1 - erfc/2)
    # z <  0: Phi = erfc/2      -> log(t/2) + (-ax^2 + g(t))   (analytic log)
    arg = jnp.where(nonneg, 1.0 - 0.5 * erfc_ax, 0.5 * t)
    extra = jnp.where(nonneg, 0.0, neg_ax2 + g)
    return jnp.log(arg) + extra


def _make_loss_kernel(bias, inv_sigma, inv_two_sigma2, n_valid, need_mask):
    """Kernel closure; bias/sigma terms and valid-row count are static."""

    def kernel(wg_ref, wc_ref, wo_ref, xg_ref, xc_ref, xo_ref,
               pfs_ref, flag_ref, out_ref):
        f32 = jnp.float32

        # Fused linear prediction, lane-dense: (F, BT) * (F, 1) broadcast,
        # then sublane (axis 0) reduce -> (1, BT).  No MXU for an N=1 matmul.
        pred = (
            jnp.sum(xg_ref[...].astype(f32) * wg_ref[...], axis=0, keepdims=True)
            + jnp.sum(xc_ref[...].astype(f32) * wc_ref[...], axis=0, keepdims=True)
            + jnp.sum(xo_ref[...].astype(f32) * wo_ref[...], axis=0, keepdims=True)
            + bias)                                        # (1, BT)

        targ = pfs_ref[...]                                # (1, BT)
        flag = flag_ref[...]                               # (1, BT)

        # flag == 0 (censored): -log Phi((pred - targ)/sigma)
        z = (pred - targ) * inv_sigma
        loss_censored = -_norm_logcdf(z)
        # flag == 1 (observed): (targ - pred)^2 / (2*sigma2)
        diff = targ - pred
        loss_observed = diff * diff * inv_two_sigma2
        per_sample = jnp.where(flag < 0.5, loss_censored, loss_observed)

        if need_mask:  # zero out batch-padding lanes (static decision)
            bt = per_sample.shape[1]
            lane = jax.lax.broadcasted_iota(jnp.int32, (1, bt), 1)
            gidx = pl.program_id(0) * bt + lane
            per_sample = jnp.where(gidx < n_valid, per_sample, 0.0)

        # Lane-dense partial-sum output: one 128-wide row per tile.
        out_ref[...] = jnp.full((1, 1, 128), jnp.sum(per_sample), f32)

    return kernel


def simple_forward(genomic, cyto, other, pfs, pfs_flag,
                   w_genomic, w_cyto, w_others, bias, sigma2,
                   *, b_tile=_B_TILE_DEFAULT):
    """Runs the batch-tiled Pallas kernel; returns the scalar combined loss.

    bias / sigma2 are treated as static hyperparameters (they are
    non-trainable Variables in the PyTorch module), so their derived scalars
    are computed host-side and baked into the kernel.
    """
    f32 = jnp.float32
    B = genomic.shape[0]

    bias_f = float(np.asarray(bias))
    sigma2_f = float(np.asarray(sigma2))
    inv_sigma = float(1.0 / np.sqrt(sigma2_f))
    inv_two_sigma2 = float(0.5 / sigma2_f)

    # Batch tiling: lane axis must be a multiple of 128.
    bt = min(b_tile, _round_up(B, 128))
    b_pad = _round_up(B, bt)
    num_tiles = b_pad // bt
    pad = b_pad - B

    def fmajor(x):  # (B, F) -> feature-major (F, B_pad); keeps f32/bf16 dtype
        x = jnp.asarray(x)
        if not jnp.issubdtype(x.dtype, jnp.floating):
            x = x.astype(f32)
        x = x.T
        return jnp.pad(x, ((0, 0), (0, pad))) if pad else x

    def lane_vec(v):  # (B,) -> lane-dense (1, B_pad) f32
        v = jnp.asarray(v).astype(f32).reshape(1, B)
        return jnp.pad(v, ((0, 0), (0, pad))) if pad else v

    xg, xc, xo = fmajor(genomic), fmajor(cyto), fmajor(other)
    tp, fl = lane_vec(pfs), lane_vec(pfs_flag)

    wg = jnp.asarray(w_genomic, f32).reshape(-1, 1)
    wc = jnp.asarray(w_cyto, f32).reshape(-1, 1)
    wo = jnp.asarray(w_others, f32).reshape(-1, 1)
    NG, NC, NO = wg.shape[0], wc.shape[0], wo.shape[0]

    kernel = _make_loss_kernel(bias_f, inv_sigma, inv_two_sigma2, B,
                               need_mask=(pad > 0))

    partials = pl.pallas_call(
        kernel,
        out_shape=jax.ShapeDtypeStruct((num_tiles, 1, 128), jnp.float32),
        grid=(num_tiles,),
        in_specs=[
            pl.BlockSpec((NG, 1), lambda i: (0, 0)),     # w_genomic (resident)
            pl.BlockSpec((NC, 1), lambda i: (0, 0)),     # w_cyto
            pl.BlockSpec((NO, 1), lambda i: (0, 0)),     # w_others
            pl.BlockSpec((NG, bt), lambda i: (0, i)),    # genomic^T tile
            pl.BlockSpec((NC, bt), lambda i: (0, i)),    # cyto^T tile
            pl.BlockSpec((NO, bt), lambda i: (0, i)),    # other^T tile
            pl.BlockSpec((1, bt), lambda i: (0, i)),     # pfs tile
            pl.BlockSpec((1, bt), lambda i: (0, i)),     # flag tile
        ],
        out_specs=pl.BlockSpec((1, 1, 128), lambda i: (i, 0, 0)),
        compiler_params=pltpu.CompilerParams(
            dimension_semantics=("parallel",)),
    )(wg, wc, wo, xg, xc, xo, tp, fl)

    # Per-tile partial sums live (replicated) in each 128-wide row; take lane 0.
    return jnp.sum(partials[:, 0, 0])


def _reference(genomic, cyto, other, pfs, flag, w_g, w_c, w_o, bias, sigma2):
    pred = (genomic @ w_g + cyto @ w_c + other @ w_o + bias).squeeze(-1)
    z = (pred - pfs) / jnp.sqrt(sigma2)
    loss0 = -jax.scipy.stats.norm.logcdf(z)
    loss1 = (pfs - pred) ** 2 / (2.0 * sigma2)
    per = jnp.where(flag < 0.5, loss0, loss1)
    return jnp.sum(per)


if __name__ == "__main__":
    # small synthetic shapes consistent with the module:
    #   batch=8, Ngenom_features=32, Ncyto_features=16, Nother_features=8
    B, NG, NC, NO = 8, 32, 16, 8
    key = jax.random.PRNGKey(0)
    k1, k2, k3, k4, k5, k6, k7, k8 = jax.random.split(key, 8)

    genomic = jax.random.normal(k1, (B, NG), jnp.float32)
    cyto = jax.random.normal(k2, (B, NC), jnp.float32)
    other = jax.random.normal(k3, (B, NO), jnp.float32)

    # deterministic synthetic parameters (module inits weights to zeros;
    # small nonzero values so the linear path is exercised)
    w_genomic = 0.05 * jax.random.normal(k4, (NG, 1), jnp.float32)
    w_cyto = 0.05 * jax.random.normal(k5, (NC, 1), jnp.float32)
    w_others = 0.05 * jax.random.normal(k6, (NO, 1), jnp.float32)
    bias = jnp.float32(20.0)      # stands in for data.clinical.D_PFS.mean()
    sigma2 = jnp.float32(25.0)    # stands in for data.clinical.D_PFS.std() ** 2

    pfs = bias + 2.5 * jax.random.normal(k7, (B,), jnp.float32)
    pfs_flag = jax.random.bernoulli(k8, 0.5, (B,)).astype(jnp.float32)

    loss = simple_forward(genomic, cyto, other, pfs, pfs_flag,
                          w_genomic, w_cyto, w_others, bias, sigma2)
    loss = jax.block_until_ready(loss)

    ref = _reference(genomic, cyto, other, pfs, pfs_flag,
                     w_genomic, w_cyto, w_others, bias, sigma2)
    np.testing.assert_allclose(np.asarray(loss), np.asarray(ref),
                               rtol=1e-4, atol=1e-4)

    # Deep-tail accuracy check for log Phi (same code path as the kernel):
    # the scaled-erfc form has <1.2e-7 relative error, so there is no longer
    # a branch hand-off near z = -5.
    zgrid = jnp.linspace(-8.0, 3.0, 221, dtype=jnp.float32)
    np.testing.assert_allclose(np.asarray(_norm_logcdf(zgrid)),
                               np.asarray(jax.scipy.stats.norm.logcdf(zgrid)),
                               rtol=1e-4, atol=1e-4)

    print("KERNEL_OK")
</pallas_src>

<mosaic_0001>
module attributes {stable_mosaic.version = 11 : i64} {
  func.func @kernel(%arg0: i32, %arg1: memref<32x1xf32, #tpu.memory_space<vmem>>, %arg2: memref<16x1xf32, #tpu.memory_space<vmem>>, %arg3: memref<8x1xf32, #tpu.memory_space<vmem>>, %arg4: memref<32x128xf32, #tpu.memory_space<vmem>>, %arg5: memref<16x128xf32, #tpu.memory_space<vmem>>, %arg6: memref<8x128xf32, #tpu.memory_space<vmem>>, %arg7: memref<1x128xf32, #tpu.memory_space<vmem>>, %arg8: memref<1x128xf32, #tpu.memory_space<vmem>>, %arg9: memref<1x1x128xf32, #tpu.memory_space<vmem>>) attributes {dimension_semantics = [#tpu.dimension_semantics<parallel>], iteration_bounds = array<i64: 1>, scalar_prefetch = 0 : i64, scratch_operands = 0 : i64, tpu.core_type = #tpu.core_type<tc>, window_params = [{pipeline_mode = #tpu.pipeline_mode<synchronous>, transform_indices = @transform_0, window_bounds = array<i64: 32, 1>}, {pipeline_mode = #tpu.pipeline_mode<synchronous>, transform_indices = @transform_1, window_bounds = array<i64: 16, 1>}, {pipeline_mode = #tpu.pipeline_mode<synchronous>, transform_indices = @transform_2, window_bounds = array<i64: 8, 1>}, {transform_indices = @transform_3, window_bounds = array<i64: 32, 128>}, {transform_indices = @transform_4, window_bounds = array<i64: 16, 128>}, {transform_indices = @transform_5, window_bounds = array<i64: 8, 128>}, {transform_indices = @transform_6, window_bounds = array<i64: 1, 128>}, {transform_indices = @transform_7, window_bounds = array<i64: 1, 128>}, {transform_indices = @transform_8, window_bounds = array<i64: 1, 1, 128>}]} {
    %c0 = arith.constant 0 : index
    %c0_0 = arith.constant 0 : index
    %0 = vector.load %arg4[%c0, %c0_0] : memref<32x128xf32, #tpu.memory_space<vmem>>, vector<32x128xf32>
    %c0_1 = arith.constant 0 : index
    %c0_2 = arith.constant 0 : index
    %1 = vector.load %arg1[%c0_1, %c0_2] : memref<32x1xf32, #tpu.memory_space<vmem>>, vector<32x1xf32>
    %2 = vector.broadcast %1 : vector<32x1xf32> to vector<32x128xf32>
    %3 = arith.mulf %0, %2 : vector<32x128xf32>
    %cst = arith.constant dense<0.000000e+00> : vector<128xf32>
    %4 = vector.multi_reduction <add>, %3, %cst [0] : vector<32x128xf32> to vector<128xf32>
    %5 = vector.shape_cast %4 : vector<128xf32> to vector<1x128xf32>
    %c0_3 = arith.constant 0 : index
    %c0_4 = arith.constant 0 : index
    %6 = vector.load %arg5[%c0_3, %c0_4] : memref<16x128xf32, #tpu.memory_space<vmem>>, vector<16x128xf32>
    %c0_5 = arith.constant 0 : index
    %c0_6 = arith.constant 0 : index
    %7 = vector.load %arg2[%c0_5, %c0_6] : memref<16x1xf32, #tpu.memory_space<vmem>>, vector<16x1xf32>
    %8 = vector.broadcast %7 : vector<16x1xf32> to vector<16x128xf32>
    %9 = arith.mulf %6, %8 : vector<16x128xf32>
    %cst_7 = arith.constant dense<0.000000e+00> : vector<128xf32>
    %10 = vector.multi_reduction <add>, %9, %cst_7 [0] : vector<16x128xf32> to vector<128xf32>
    %11 = vector.shape_cast %10 : vector<128xf32> to vector<1x128xf32>
    %12 = arith.addf %5, %11 : vector<1x128xf32>
    %c0_8 = arith.constant 0 : index
    %c0_9 = arith.constant 0 : index
    %13 = vector.load %arg6[%c0_8, %c0_9] : memref<8x128xf32, #tpu.memory_space<vmem>>, vector<8x128xf32>
    %c0_10 = arith.constant 0 : index
    %c0_11 = arith.constant 0 : index
    %14 = vector.load %arg3[%c0_10, %c0_11] : memref<8x1xf32, #tpu.memory_space<vmem>>, vector<8x1xf32>
    %15 = vector.broadcast %14 : vector<8x1xf32> to vector<8x128xf32>
    %16 = arith.mulf %13, %15 : vector<8x128xf32>
    %cst_12 = arith.constant dense<0.000000e+00> : vector<128xf32>
    %17 = vector.multi_reduction <add>, %16, %cst_12 [0] : vector<8x128xf32> to vector<128xf32>
    %18 = vector.shape_cast %17 : vector<128xf32> to vector<1x128xf32>
    %19 = arith.addf %12, %18 : vector<1x128xf32>
    %cst_13 = arith.constant 2.000000e+01 : f32
    %20 = vector.broadcast %cst_13 : f32 to vector<1x128xf32>
    %21 = arith.addf %19, %20 : vector<1x128xf32>
    %c0_14 = arith.constant 0 : index
    %c0_15 = arith.constant 0 : index
    %22 = vector.load %arg7[%c0_14, %c0_15] : memref<1x128xf32, #tpu.memory_space<vmem>>, vector<1x128xf32>
    %c0_16 = arith.constant 0 : index
    %c0_17 = arith.constant 0 : index
    %23 = vector.load %arg8[%c0_16, %c0_17] : memref<1x128xf32, #tpu.memory_space<vmem>>, vector<1x128xf32>
    %24 = arith.subf %21, %22 : vector<1x128xf32>
    %cst_18 = arith.constant 2.000000e-01 : f32
    %25 = vector.broadcast %cst_18 : f32 to vector<1x128xf32>
    %26 = arith.mulf %24, %25 : vector<1x128xf32>
    %27 = math.absf %26 : vector<1x128xf32>
    %cst_19 = arith.constant 0.707106769 : f32
    %28 = vector.broadcast %cst_19 : f32 to vector<1x128xf32>
    %29 = arith.mulf %27, %28 : vector<1x128xf32>
    %cst_20 = arith.constant 5.000000e-01 : f32
    %30 = vector.broadcast %cst_20 : f32 to vector<1x128xf32>
    %31 = arith.mulf %30, %29 : vector<1x128xf32>
    %cst_21 = arith.constant 1.000000e+00 : f32
    %32 = vector.broadcast %cst_21 : f32 to vector<1x128xf32>
    %33 = arith.addf %32, %31 : vector<1x128xf32>
    %cst_22 = arith.constant 1.000000e+00 : f32
    %34 = vector.broadcast %cst_22 : f32 to vector<1x128xf32>
    %35 = arith.divf %34, %33 : vector<1x128xf32>
    %cst_23 = arith.constant 0.170872763 : f32
    %36 = vector.broadcast %cst_23 : f32 to vector<1x128xf32>
    %37 = arith.mulf %35, %36 : vector<1x128xf32>
    %cst_24 = arith.constant -0.822152256 : f32
    %38 = vector.broadcast %cst_24 : f32 to vector<1x128xf32>
    %39 = arith.addf %38, %37 : vector<1x128xf32>
    %40 = arith.mulf %35, %39 : vector<1x128xf32>
    %cst_25 = arith.constant 1.48851585 : f32
    %41 = vector.broadcast %cst_25 : f32 to vector<1x128xf32>
    %42 = arith.addf %41, %40 : vector<1x128xf32>
    %43 = arith.mulf %35, %42 : vector<1x128xf32>
    %cst_26 = arith.constant -1.13520396 : f32
    %44 = vector.broadcast %cst_26 : f32 to vector<1x128xf32>
    %45 = arith.addf %44, %43 : vector<1x128xf32>
    %46 = arith.mulf %35, %45 : vector<1x128xf32>
    %cst_27 = arith.constant 0.278868079 : f32
    %47 = vector.broadcast %cst_27 : f32 to vector<1x128xf32>
    %48 = arith.addf %47, %46 : vector<1x128xf32>
    %49 = arith.mulf %35, %48 : vector<1x128xf32>
    %cst_28 = arith.constant -0.186288059 : f32
    %50 = vector.broadcast %cst_28 : f32 to vector<1x128xf32>
    %51 = arith.addf %50, %49 : vector<1x128xf32>
    %52 = arith.mulf %35, %51 : vector<1x128xf32>
    %cst_29 = arith.constant 0.0967841818 : f32
    %53 = vector.broadcast %cst_29 : f32 to vector<1x128xf32>
    %54 = arith.addf %53, %52 : vector<1x128xf32>
    %55 = arith.mulf %35, %54 : vector<1x128xf32>
    %cst_30 = arith.constant 0.374091953 : f32
    %56 = vector.broadcast %cst_30 : f32 to vector<1x128xf32>
    %57 = arith.addf %56, %55 : vector<1x128xf32>
    %58 = arith.mulf %35, %57 : vector<1x128xf32>
    %cst_31 = arith.constant 1.00002372 : f32
    %59 = vector.broadcast %cst_31 : f32 to vector<1x128xf32>
    %60 = arith.addf %59, %58 : vector<1x128xf32>
    %61 = arith.mulf %35, %60 : vector<1x128xf32>
    %cst_32 = arith.constant -1.26551223 : f32
    %62 = vector.broadcast %cst_32 : f32 to vector<1x128xf32>
    %63 = arith.addf %62, %61 : vector<1x128xf32>
    %64 = arith.mulf %29, %29 : vector<1x128xf32>
    %cst_33 = arith.constant 0.000000e+00 : f32
    %65 = vector.broadcast %cst_33 : f32 to vector<1x128xf32>
    %66 = arith.subf %65, %64 : vector<1x128xf32>
    %67 = arith.addf %66, %63 : vector<1x128xf32>
    %68 = math.exp %67 : vector<1x128xf32>
    %69 = arith.mulf %35, %68 : vector<1x128xf32>
    %cst_34 = arith.constant 0.000000e+00 : f32
    %70 = vector.broadcast %cst_34 : f32 to vector<1x128xf32>
    %71 = arith.cmpf oge, %26, %70 : vector<1x128xf32>
    %cst_35 = arith.constant 5.000000e-01 : f32
    %72 = vector.broadcast %cst_35 : f32 to vector<1x128xf32>
    %73 = arith.mulf %72, %69 : vector<1x128xf32>
    %cst_36 = arith.constant 1.000000e+00 : f32
    %74 = vector.broadcast %cst_36 : f32 to vector<1x128xf32>
    %75 = arith.subf %74, %73 : vector<1x128xf32>
    %cst_37 = arith.constant 5.000000e-01 : f32
    %76 = vector.broadcast %cst_37 : f32 to vector<1x128xf32>
    %77 = arith.mulf %76, %35 : vector<1x128xf32>
    %78 = arith.select %71, %75, %77 : vector<1x128xi1>, vector<1x128xf32>
    %79 = arith.addf %66, %63 : vector<1x128xf32>
    %cst_38 = arith.constant 0.000000e+00 : f32
    %80 = vector.broadcast %cst_38 : f32 to vector<1x128xf32>
    %81 = arith.select %71, %80, %79 : vector<1x128xi1>, vector<1x128xf32>
    %82 = math.log %78 : vector<1x128xf32>
    %83 = arith.addf %82, %81 : vector<1x128xf32>
    %cst_39 = arith.constant 0.000000e+00 : f32
    %84 = vector.broadcast %cst_39 : f32 to vector<1x128xf32>
    %85 = arith.subf %84, %83 : vector<1x128xf32>
    %86 = arith.subf %22, %21 : vector<1x128xf32>
    %87 = arith.mulf %86, %86 : vector<1x128xf32>
    %cst_40 = arith.constant 2.000000e-02 : f32
    %88 = vector.broadcast %cst_40 : f32 to vector<1x128xf32>
    %89 = arith.mulf %87, %88 : vector<1x128xf32>
    %cst_41 = arith.constant 5.000000e-01 : f32
    %90 = vector.broadcast %cst_41 : f32 to vector<1x128xf32>
    %91 = arith.cmpf olt, %23, %90 : vector<1x128xf32>
    %92 = arith.select %91, %85, %89 : vector<1x128xi1>, vector<1x128xf32>
    %93 = tpu.iota {dimensions = array<i32: 1>} : vector<1x128xi32>
    %c128_i32 = arith.constant 128 : i32
    %94 = arith.muli %arg0, %c128_i32 : i32
    %95 = vector.broadcast %94 : i32 to vector<1x128xi32>
    %96 = arith.addi %95, %93 : vector<1x128xi32>
    %c8_i32 = arith.constant 8 : i32
    %97 = vector.broadcast %c8_i32 : i32 to vector<1x128xi32>
    %98 = arith.cmpi slt, %96, %97 : vector<1x128xi32>
    %cst_42 = arith.constant 0.000000e+00 : f32
    %99 = vector.broadcast %cst_42 : f32 to vector<1x128xf32>
    %100 = arith.select %98, %92, %99 : vector<1x128xi1>, vector<1x128xf32>
    %101 = vector.shape_cast %100 : vector<1x128xf32> to vector<1x1x128xf32>
    %cst_43 = arith.constant dense<0.000000e+00> : vector<1xf32>
    %102 = vector.multi_reduction <add>, %101, %cst_43 [1, 2] : vector<1x1x128xf32> to vector<1xf32>
    %103 = vector.shape_cast %102 : vector<1xf32> to vector<1x1x1xf32>
    %104 = vector.extract %103[0, 0, 0] : f32 from vector<1x1x1xf32>
    %105 = vector.broadcast %104 : f32 to vector<1x1x128xf32>
    %c0_44 = arith.constant 0 : index
    %c0_45 = arith.constant 0 : index
    %c0_46 = arith.constant 0 : index
    %106 = vector.load %arg9[%c0_44, %c0_45, %c0_46] : memref<1x1x128xf32, #tpu.memory_space<vmem>>, vector<1x1x128xf32>
    tpu.vector_store %arg9[%c0_44, %c0_45, %c0_46], %105 {strides = array<i32>} : memref<1x1x128xf32, #tpu.memory_space<vmem>>, vector<1x1x128xf32>,
    return
  }
  func.func @transform_0(%arg0: i32) -> (i32, i32) {
    %c0_i32 = arith.constant 0 : i32
    %c0_i32_0 = arith.constant 0 : i32
    %c0_i32_1 = arith.constant 0 : i32
    return %c0_i32, %c0_i32_0 : i32, i32
  }
  func.func @transform_1(%arg0: i32) -> (i32, i32) {
    %c0_i32 = arith.constant 0 : i32
    %c0_i32_0 = arith.constant 0 : i32
    %c0_i32_1 = arith.constant 0 : i32
    return %c0_i32, %c0_i32_0 : i32, i32
  }
  func.func @transform_2(%arg0: i32) -> (i32, i32) {
    %c0_i32 = arith.constant 0 : i32
    %c0_i32_0 = arith.constant 0 : i32
    %c0_i32_1 = arith.constant 0 : i32
    return %c0_i32, %c0_i32_0 : i32, i32
  }
  func.func @transform_3(%arg0: i32) -> (i32, i32) {
    %c0_i32 = arith.constant 0 : i32
    %c0_i32_0 = arith.constant 0 : i32
    return %c0_i32, %arg0 : i32, i32
  }
  func.func @transform_4(%arg0: i32) -> (i32, i32) {
    %c0_i32 = arith.constant 0 : i32
    %c0_i32_0 = arith.constant 0 : i32
    return %c0_i32, %arg0 : i32, i32
  }
  func.func @transform_5(%arg0: i32) -> (i32, i32) {
    %c0_i32 = arith.constant 0 : i32
    %c0_i32_0 = arith.constant 0 : i32
    return %c0_i32, %arg0 : i32, i32
  }
  func.func @transform_6(%arg0: i32) -> (i32, i32) {
    %c0_i32 = arith.constant 0 : i32
    %c0_i32_0 = arith.constant 0 : i32
    return %c0_i32, %arg0 : i32, i32
  }
  func.func @transform_7(%arg0: i32) -> (i32, i32) {
    %c0_i32 = arith.constant 0 : i32
    %c0_i32_0 = arith.constant 0 : i32
    return %c0_i32, %arg0 : i32, i32
  }
  func.func @transform_8(%arg0: i32) -> (i32, i32, i32) {
    %c0_i32 = arith.constant 0 : i32
    %c0_i32_0 = arith.constant 0 : i32
    %c0_i32_1 = arith.constant 0 : i32
    return %arg0, %c0_i32, %c0_i32_0 : i32, i32, i32
  }
}

</mosaic_0001>

<llo_original>
// kernel: tpu_custom_call.1
$region0: #{tpu_custom_call.1}
  #allocation0 [shape = 'u32[]', space=smem, size = 0x4, offset = 0x4, fixed_abs, tag = 'smem constant byte address 0x4 - core index']
  #allocation1 [shape = 'u32[144,128]{1,0:T(1,128)}', space=vmem, size = 0x12000, scoped, tag = 'internal scratch']
  %s0 = inlined_call_operand.vmem [shape: f32[32,1], index: 0, kind: input, shape index: {}]
  %s1 = inlined_call_operand.vmem [shape: f32[16,1], index: 1, kind: input, shape index: {}]
  %s2 = inlined_call_operand.vmem [shape: f32[8,1], index: 2, kind: input, shape index: {}]
  %s3 = inlined_call_operand.vmem [shape: f32[32,128], index: 3, kind: input, shape index: {}]
  %s4 = inlined_call_operand.vmem [shape: f32[16,128], index: 4, kind: input, shape index: {}]
  %s5 = inlined_call_operand.vmem [shape: f32[8,128], index: 5, kind: input, shape index: {}]
  %s6 = inlined_call_operand.vmem [shape: f32[1,128], index: 6, kind: input, shape index: {}]
  %s7 = inlined_call_operand.vmem [shape: f32[1,128], index: 7, kind: input, shape index: {}]
  %s8 = inlined_call_operand.hbm [shape: f32[1,1,128], index: 8, kind: output, shape index: {}]
  %s9 = sld [smem:[#allocation0]]
  $region42: #{tpu_custom_call.1} parent=0
    _
  %s11 = ssub.s32 1, %s9
  %s12 = scalar_select 0, %s11, %s9
  $region1: #{tpu_custom_call.1} parent=0
    #allocation2 [shape = 'u8[512]{0}', space=vmem, size = 0x400, scoped, tag = 'output window, operand 0, single buffered']
    #allocation3 [shape = 's32[1]{0}', space=sflag, size = 0x4, scoped, tag = 'scoped memory for tpu_custom_call.1']
    %13 = vsyncpa [#allocation3], 0
    // Predicated region
    $region2: #{tpu_custom_call.1} parent=1 // pred_check
      _
    $region3: #{tpu_custom_call.1} parent=1 // pred_check_branch
      %15 = sbr.rel (0) target = $region5
    $region4: #{tpu_custom_call.1} parent=1 // pred_region
      _
    $region5: #{tpu_custom_call.1} parent=1 // pred_fallthru
      _
    // Predicated region
    $region6: #{tpu_custom_call.1} parent=1 // pred_check
      _
    $region7: #{tpu_custom_call.1} parent=1 // pred_check_branch
      %17 = sbr.rel (0) target = $region9
    $region8: #{tpu_custom_call.1} parent=1 // pred_region
      _
    $region9: #{tpu_custom_call.1} parent=1 // pred_fallthru
      _
    // Predicated region
    $region10: #{tpu_custom_call.1} parent=1 // pred_check
      _
    $region11: #{tpu_custom_call.1} parent=1 // pred_check_branch
      %19 = sbr.rel (0) target = $region13
    $region12: #{tpu_custom_call.1} parent=1 // pred_region
      _
    $region13: #{tpu_custom_call.1} parent=1 // pred_fallthru
      _
    // Predicated region
    $region14: #{tpu_custom_call.1} parent=1 // pred_check
      _
    $region15: #{tpu_custom_call.1} parent=1 // pred_check_branch
      %21 = sbr.rel (0) target = $region17
    $region16: #{tpu_custom_call.1} parent=1 // pred_region
      _
    $region17: #{tpu_custom_call.1} parent=1 // pred_fallthru
      _
    // Predicated region
    $region18: #{tpu_custom_call.1} parent=1 // pred_check
      _
    $region19: #{tpu_custom_call.1} parent=1 // pred_check_branch
      %23 = sbr.rel (0) target = $region21
    $region20: #{tpu_custom_call.1} parent=1 // pred_region
      _
    $region21: #{tpu_custom_call.1} parent=1 // pred_fallthru
      _
    // Predicated region
    $region22: #{tpu_custom_call.1} parent=1 // pred_check
      _
    $region23: #{tpu_custom_call.1} parent=1 // pred_check_branch
      %25 = sbr.rel (0) target = $region25
    $region24: #{tpu_custom_call.1} parent=1 // pred_region
      _
    $region25: #{tpu_custom_call.1} parent=1 // pred_fallthru
      _
    // Predicated region
    $region26: #{tpu_custom_call.1} parent=1 // pred_check
      _
    $region27: #{tpu_custom_call.1} parent=1 // pred_check_branch
      %27 = sbr.rel (0) target = $region29
    $region28: #{tpu_custom_call.1} parent=1 // pred_region
      _
    $region29: #{tpu_custom_call.1} parent=1 // pred_fallthru
      _
    // Predicated region
    $region30: #{tpu_custom_call.1} parent=1 // pred_check
      _
    $region31: #{tpu_custom_call.1} parent=1 // pred_check_branch
      %29 = sbr.rel (0) target = $region33
    $region32: #{tpu_custom_call.1} parent=1 // pred_region
      _
    $region33: #{tpu_custom_call.1} parent=1 // pred_fallthru
      _
    %v30 = vld [vmem:[%s3] sm:$0xff]
    %v31 = vld [vmem:[%s3 + $0x8] sm:$0xff]
    %v32 = vld [vmem:[%s3 + $0x10] sm:$0xff]
    %v33 = vld [vmem:[%s3 + $0x18] sm:$0xff]
    %v34 = vld [vmem:[%s0] sm:$0xff]
    %v35 = vld [vmem:[%s0 + $0x8] sm:$0xff]
    %v36 = vld [vmem:[%s0 + $0x10] sm:$0xff]
    %v37 = vld [vmem:[%s0 + $0x18] sm:$0xff]
    %39 = vset.pattern.permute.xlu0 0
    %40 = vperm.xlu0 %39, %v34
    %v41 = vpop.permute.xlu0 %40
    %44 = vset.pattern.permute.xlu0 0
    %45 = vperm.xlu0 %44, %v35
    %v46 = vpop.permute.xlu0 %45
    %49 = vset.pattern.permute.xlu0 0
    %50 = vperm.xlu0 %49, %v36
    %v51 = vpop.permute.xlu0 %50
    %54 = vset.pattern.permute.xlu0 0
    %55 = vperm.xlu0 %54, %v37
    %v56 = vpop.permute.xlu0 %55
    %v58 = vmul.f32 %v30, %v41
    %v59 = vmul.f32 %v31, %v46
    %v60 = vmul.f32 %v32, %v51
    %v61 = vmul.f32 %v33, %v56
    %v62 = vadd.f32 %v58, %v59
    %v63 = vadd.f32 %v62, %v60
    %v64 = vadd.f32 %v63, %v61
    %v65 = vrot.slane %v64, 4
    %v66 = vadd.f32 %v64, %v65
    %v67 = vrot.slane %v66, 2
    %v68 = vadd.f32 %v66, %v67
    %v69 = vrot.slane %v68, 1
    %v70 = vadd.f32 %v68, %v69
    %v71 = vld [vmem:[%s4] sm:$0xff]
    %v72 = vld [vmem:[%s4 + $0x8] sm:$0xff]
    %v73 = vld [vmem:[%s1] sm:$0xff]
    %v74 = vld [vmem:[%s1 + $0x8] sm:$0xff]
    %76 = vset.pattern.permute.xlu0 0
    %77 = vperm.xlu0 %76, %v73
    %v78 = vpop.permute.xlu0 %77
    %81 = vset.pattern.permute.xlu0 0
    %82 = vperm.xlu0 %81, %v74
    %v83 = vpop.permute.xlu0 %82
    %v85 = vmul.f32 %v71, %v78
    %v86 = vmul.f32 %v72, %v83
    %v87 = vadd.f32 %v85, %v86
    %v88 = vrot.slane %v87, 4
    %v89 = vadd.f32 %v87, %v88
    %v90 = vrot.slane %v89, 2
    %v91 = vadd.f32 %v89, %v90
    %v92 = vrot.slane %v91, 1
    %v93 = vadd.f32 %v91, %v92
    %v94 = vadd.f32 %v70, %v93
    %v95 = vld [vmem:[%s5] sm:$0xff]
    %v96 = vld [vmem:[%s2] sm:$0xff]
    %98 = vset.pattern.permute.xlu0 0
    %99 = vperm.xlu0 %98, %v96
    %v100 = vpop.permute.xlu0 %99
    %v102 = vmul.f32 %v95, %v100
    %v103 = vrot.slane %v102, 4
    %v104 = vadd.f32 %v102, %v103
    %v105 = vrot.slane %v104, 2
    %v106 = vadd.f32 %v104, %v105
    %v107 = vrot.slane %v106, 1
    %v108 = vadd.f32 %v106, %v107
    %v109 = vadd.f32 %v94, %v108
    %v110 = vadd.f32 %v109, 20.0
    %v111 = vld [vmem:[%s6] sm:$0x1]
    %v112 = vld [vmem:[%s7] sm:$0x1]
    %v113 = vsub.f32 %v110, %v111
    %v114 = vmul.f32 %v113, 0.2
    %v115 = vand.u32 2147483647, %v114
    %v116 = vmul.f32 %v115, 0.70710677
    %v117 = vmul.f32 %v116, 0.5
    %v118 = vadd.f32 %v117, 1.0
    %v119 = vrcp.pop %v118
    %v120 = vmul.f32 1.0, %v119
    %v121 = vmul.f32 %v120, 0.17087276
    %v122 = vadd.f32 %v121, -0.82215226
    %v123 = vmul.f32 %v120, %v122
    %v124 = vadd.f32 %v123, 1.4885159
    %v125 = vmul.f32 %v120, %v124
    %v126 = vadd.f32 %v125, -1.135204
    %v127 = vmul.f32 %v120, %v126
    %v128 = vadd.f32 %v127, 0.27886808
    %v129 = vmul.f32 %v120, %v128
    %v130 = vadd.f32 %v129, -0.18628806
    %v131 = vmul.f32 %v120, %v130
    %v132 = vadd.f32 %v131, 0.09678418
    %v133 = vmul.f32 %v120, %v132
    %v134 = vadd.f32 %v133, 0.37409195
    %v135 = vmul.f32 %v120, %v134
    %v136 = vadd.f32 %v135, 1.0000237
    %v137 = vmul.f32 %v120, %v136
    %v138 = vadd.f32 %v137, -1.2655122
    %v139 = vmul.f32 %v116, %v116
    %v140 = vsub.f32 0.0, %v139
    %v141 = vadd.f32 %v140, %v138
    %v142 = vmul.f32 %v141, 1.442695
    %v143 = vpow.pop %v142
    %v144 = vmul.f32 %v120, %v143
    %vm145 = vcmp.ge.f32.partialorder %v114, 0.0
    %v146 = vmul.f32 %v144, 0.5
    %v147 = vsub.f32 1.0, %v146
    %v148 = vmul.f32 %v120, 0.5
    %v149 = vsel %vm145, %v147, %v148
    %v150 = vsel %vm145, 0.0, %v141
    %v151 = vlog2.pop %v149
    %v152 = vmul.f32 %v151, 0.6931472
    %v153 = vadd.f32 %v152, %v150
    %v154 = vsub.f32 0.0, %v153
    %v155 = vsub.f32 %v111, %v110
    %v156 = vmul.f32 %v155, %v155
    %v157 = vmul.f32 %v156, 0.02
    %vm158 = vcmp.lt.f32.partialorder %v112, 0.5
    %v159 = vsel %vm158, %v154, %v157
    %v160 = vlaneseq
    %v161 = vand.u32 %v160, 127
    %s162 = smul.u32 0, 128
    %v163 = vstv %s162
    %v164 = vadd.s32 %v163, %v161
    %vm165 = vcmp.lt.s32.totalorder %v164, 8
    %v166 = vsel %vm165, %v159, 0.0
    %vm167 = vcmask 1040384
    %v168 = vsel %vm167, %v166, 0.0
    %169 = vadd.xlane.f32.xlu0 %v168
    %v170 = vpop.xlane.xlu0 %169
    %v171 = vrot.slane %v170, 4
    %v172 = vadd.f32 %v170, %v171
    %v173 = vrot.slane %v172, 2
    %v174 = vadd.f32 %v172, %v173
    %v175 = vrot.slane %v174, 1
    %v176 = vadd.f32 %v174, %v175
    %s177 = vtos %v176
    %v178 = vstv %s177
    %179 = vst [vmem:[#allocation2] sm:$0x1] %v178
    // Predicated region
    $region34: #{tpu_custom_call.1} parent=1 // pred_check
      _
    $region35: #{tpu_custom_call.1} parent=1 // pred_check_branch
      %181 = sbr.rel (0) target = $region37
    $region36: #{tpu_custom_call.1} parent=1 // pred_region
      %s183 = ssub.s32 16, 16
      %184 = vsyncadd [#allocation3], %s183
      %s186 = sshll.u32 [#allocation2], 4
      %s187 = int_to_ptr.vmem [resolvable:$true] %s186
      %189 = dma.vmem_to_hbm [thread:$0]  %s187, 16, %s8, [#allocation3]
    $region37: #{tpu_custom_call.1} parent=1 // pred_fallthru
      _
    // Predicated region
    $region38: #{tpu_custom_call.1} parent=1 // pred_check
      _
    $region39: #{tpu_custom_call.1} parent=1 // pred_check_branch
      %191 = sbr.rel (0) target = $region41
    $region40: #{tpu_custom_call.1} parent=1 // pred_region
      %192 = dma.done [#allocation3], 16
    $region41: #{tpu_custom_call.1} parent=1 // pred_fallthru
      _
    %193 = vsyncpa [#allocation3], 1

</llo_original>
